<compile_context>
chip_gen: v5e
topology: v5e:2x2
jax: 0.10.0
libtpu: 0.0.40
codegen_flags: <defaults>
</compile_context>

<pallas_src>
import functools

import jax
import jax.numpy as jnp
from jax import lax
from jax.experimental import pallas as pl
from jax.experimental.pallas import tpu as pltpu


def _round_up(x, m):
    return (x + m - 1) // m * m


# --------------------------------------------------------------------------
# Kernel
# --------------------------------------------------------------------------
def _fused_blocks_kernel(x_ref, w1_ref, b1_ref, w2_ref, b2_ref, o_ref):
    """Apply every ConvBNReLURes1D block to one lane-dense [C, tn] tile.

    x_ref : [1, C, tn]         activation tile (compute dtype, points on lanes)
    w1_ref: [blocks, Ce, C]    conv1 weight with BN1 folded (compute dtype)
    b1_ref: [blocks, Ce, 1]    conv1 bias   with BN1 folded (f32)
    w2_ref: [blocks, C, Ce]    conv2 weight with BN2 folded (compute dtype)
    b2_ref: [blocks, C, 1]     conv2 bias   with BN2 folded (f32)
    o_ref : [1, C, tn]
    """
    n_blocks = w1_ref.shape[0]
    mm_dtype = w1_ref.dtype
    x32 = x_ref[0].astype(jnp.float32)                     # residual in f32

    def block_body(blk, x32):
        # net1: ReLU(BN1(Conv1(x)))  ==  relu(W1 @ x + b1)  (MXU, f32 acc)
        h = jnp.dot(w1_ref[blk], x32.astype(mm_dtype),
                    preferred_element_type=jnp.float32)
        h = jnp.maximum(h + b1_ref[blk], 0.0)              # [Ce, tn] f32
        # net2: BN2(Conv2(h))        ==  W2 @ h + b2
        y = jnp.dot(w2_ref[blk], h.astype(mm_dtype),
                    preferred_element_type=jnp.float32)
        y = y + b2_ref[blk]                                # [C, tn] f32
        # residual + final activation (f32 epilogue)
        return jnp.maximum(y + x32, 0.0)

    # fori_loop (not a Python unroll) bounds live ranges for deep stacks.
    x32 = lax.fori_loop(0, n_blocks, block_body, x32, unroll=(n_blocks <= 2))
    o_ref[0] = x32.astype(o_ref.dtype)


# --------------------------------------------------------------------------
# VMEM-aware tile selection
# --------------------------------------------------------------------------
def _vmem_capacity_bytes():
    try:
        return int(pltpu.get_tpu_info().vmem_capacity_bytes)
    except Exception:
        return 64 * 2 ** 20          # conservative fallback (v7x per-core VMEM)


def _select_tn(C, Ce, n_blocks, N, act_itemsize, w_itemsize, budget, tn_req):
    n_cap = _round_up(N, 128)
    if tn_req is not None:
        return min(_round_up(tn_req, 128), n_cap)
    # Single-buffered (pl.Buffered(1)) weight stack + f32 biases, VMEM-padded.
    wbytes = n_blocks * (_round_up(Ce, 8) * _round_up(C, 128)
                         + _round_up(C, 8) * _round_up(Ce, 128)) * w_itemsize
    wbytes += n_blocks * (_round_up(Ce, 8) + _round_up(C, 8)) * 128 * 4
    for tn in (1024, 512, 256, 128):
        tn_eff = min(tn, n_cap)
        tiles = 2 * 2 * _round_up(C, 8) * tn_eff * act_itemsize   # in+out, 2-deep
        temps = (2 * _round_up(C, 8) + _round_up(Ce, 8)) * tn_eff * 4  # x32/h/y
        if wbytes + tiles + temps <= budget:
            return tn_eff
    return min(128, n_cap)


# --------------------------------------------------------------------------
# Wrapper
# --------------------------------------------------------------------------
@functools.partial(jax.jit, static_argnames=("tn", "compute_dtype"))
def pos_extraction_forward(x_bcn, params, *, tn=None, compute_dtype=jnp.bfloat16):
    """x_bcn: [B, C, N] -> [B, C, N]  (matches PyTorch PosExtraction.forward)."""
    w1, b1, w2, b2 = params
    B, C, N = x_bcn.shape
    n_blocks, Ce, _ = w1.shape

    cdt = jnp.dtype(compute_dtype)
    x_in = x_bcn.astype(cdt)
    w1c, w2c = w1.astype(cdt), w2.astype(cdt)
    b1f, b2f = b1.astype(jnp.float32), b2.astype(jnp.float32)

    vmem_cap = _vmem_capacity_bytes()
    budget = int(0.75 * vmem_cap)
    tn_eff = _select_tn(C, Ce, n_blocks, N, cdt.itemsize, cdt.itemsize,
                        budget, tn)
    n_tiles = pl.cdiv(N, tn_eff)

    flops = 4 * n_blocks * B * N * C * Ce          # 2 matmuls/block, 2*M*K*N each
    bytes_accessed = (2 * B * C * N * cdt.itemsize
                      + n_blocks * 2 * C * Ce * cdt.itemsize
                      + n_blocks * (C + Ce) * 4)

    def weight_spec(shape):
        # Constant index_map -> fetched once; single-buffer to save VMEM.
        return pl.BlockSpec(shape, lambda b, j: (0, 0, 0),
                            pipeline_mode=pl.Buffered(1))

    out = pl.pallas_call(
        _fused_blocks_kernel,
        out_shape=jax.ShapeDtypeStruct((B, C, N), cdt),
        grid_spec=pltpu.PrefetchScalarGridSpec(
            num_scalar_prefetch=0,
            grid=(B, n_tiles),
            in_specs=[
                pl.BlockSpec((1, C, tn_eff), lambda b, j: (b, 0, j)),  # x tile
                weight_spec((n_blocks, Ce, C)),                        # W1
                weight_spec((n_blocks, Ce, 1)),                        # b1
                weight_spec((n_blocks, C, Ce)),                        # W2
                weight_spec((n_blocks, C, 1)),                         # b2
            ],
            out_specs=pl.BlockSpec((1, C, tn_eff), lambda b, j: (b, 0, j)),
        ),
        compiler_params=pltpu.CompilerParams(
            dimension_semantics=("parallel", "parallel"),
            vmem_limit_bytes=budget),
        cost_estimate=pl.CostEstimate(flops=flops, transcendentals=0,
                                      bytes_accessed=bytes_accessed),
        input_output_aliases={0: 0},
    )(x_in, w1c, b1f, w2c, b2f)
    return out


# --------------------------------------------------------------------------
# Parameter setup (BN folding) + reference
# --------------------------------------------------------------------------
def _fold_bn(conv_w, conv_b, gamma, beta, mean, var, eps=1e-5):
    """Fold eval-mode BatchNorm1d into a k=1 Conv1d.

    conv_w: [C_out, C_in], conv_b: [C_out] -> (w [C_out, C_in], b [C_out, 1]).
    """
    scale = gamma / jnp.sqrt(var + eps)
    w = conv_w * scale[:, None]
    b = scale * conv_b + (beta - mean * scale)
    return w.astype(jnp.float32), b[:, None].astype(jnp.float32)


def init_pos_extraction_params(key, channels, blocks=1, res_expansion=1):
    """Deterministic synthetic parameters, stacked per block and BN-folded."""
    ce = int(channels * res_expansion)
    w1s, b1s, w2s, b2s = [], [], [], []
    for blk in range(blocks):
        keys = jax.random.split(jax.random.fold_in(key, blk), 12)
        # Conv1d(channels -> ce, k=1) + BatchNorm1d(ce)
        w1 = 0.3 * jax.random.normal(keys[0], (ce, channels), jnp.float32)
        c1b = 0.1 * jax.random.normal(keys[1], (ce,), jnp.float32)
        g1 = 1.0 + 0.05 * jax.random.normal(keys[2], (ce,), jnp.float32)
        bt1 = 0.05 * jax.random.normal(keys[3], (ce,), jnp.float32)
        m1 = 0.02 * jax.random.normal(keys[4], (ce,), jnp.float32)
        v1 = 1.0 + 0.1 * jnp.abs(jax.random.normal(keys[5], (ce,), jnp.float32))
        # Conv1d(ce -> channels, k=1) + BatchNorm1d(channels)
        w2 = 0.3 * jax.random.normal(keys[6], (channels, ce), jnp.float32)
        c2b = 0.1 * jax.random.normal(keys[7], (channels,), jnp.float32)
        g2 = 1.0 + 0.05 * jax.random.normal(keys[8], (channels,), jnp.float32)
        bt2 = 0.05 * jax.random.normal(keys[9], (channels,), jnp.float32)
        m2 = 0.02 * jax.random.normal(keys[10], (channels,), jnp.float32)
        v2 = 1.0 + 0.1 * jnp.abs(jax.random.normal(keys[11], (channels,), jnp.float32))

        fw1, fb1 = _fold_bn(w1, c1b, g1, bt1, m1, v1)
        fw2, fb2 = _fold_bn(w2, c2b, g2, bt2, m2, v2)
        w1s.append(fw1); b1s.append(fb1); w2s.append(fw2); b2s.append(fb2)
    return (jnp.stack(w1s), jnp.stack(b1s), jnp.stack(w2s), jnp.stack(b2s))


def _reference_forward(x_bcn, params):
    """Plain-JAX f32 reference with identical math."""
    w1, b1, w2, b2 = params
    x = x_bcn.astype(jnp.float32)
    for blk in range(w1.shape[0]):
        h = jnp.maximum(jnp.einsum('ec,bcn->ben', w1[blk], x) + b1[blk][None], 0.0)
        x = jnp.maximum(jnp.einsum('ce,ben->bcn', w2[blk], h) + b2[blk][None] + x, 0.0)
    return x


if __name__ == "__main__":
    B, C, N = 2, 4, 16            # input[b, d, g] per PosExtraction docstring
    BLOCKS = 2

    key = jax.random.PRNGKey(0)
    kx, kp = jax.random.split(key)
    x = jax.random.normal(kx, (B, C, N), jnp.float32)
    params = init_pos_extraction_params(kp, channels=C, blocks=BLOCKS,
                                        res_expansion=1)

    ref = _reference_forward(x, params)

    # Exactness check: f32 compute path must match the plain-JAX reference.
    out_f32 = jax.block_until_ready(
        pos_extraction_forward(x, params, compute_dtype=jnp.float32))
    assert out_f32.shape == (B, C, N)
    assert jnp.allclose(out_f32, ref, atol=1e-5, rtol=1e-5), "f32 mismatch"

    # Default fast path: bf16 activations/weights, f32 epilogue.
    out_bf16 = jax.block_until_ready(pos_extraction_forward(x, params))
    assert out_bf16.shape == (B, C, N)
    assert out_bf16.dtype == jnp.bfloat16
    assert jnp.allclose(out_bf16.astype(jnp.float32), ref,
                        atol=8e-2, rtol=8e-2), "bf16 mismatch"

    print("KERNEL_OK")
</pallas_src>

<mosaic_0001>
module attributes {stable_mosaic.version = 11 : i64} {
  func.func @_fused_blocks_kernel(%arg0: i32, %arg1: i32, %arg2: memref<1x4x128xf32, #tpu.memory_space<vmem>>, %arg3: memref<2x4x4xf32, #tpu.memory_space<vmem>>, %arg4: memref<2x4x1xf32, #tpu.memory_space<vmem>>, %arg5: memref<2x4x4xf32, #tpu.memory_space<vmem>>, %arg6: memref<2x4x1xf32, #tpu.memory_space<vmem>>, %arg7: memref<1x4x128xf32, #tpu.memory_space<vmem>>) attributes {dimension_semantics = [#tpu.dimension_semantics<parallel>, #tpu.dimension_semantics<parallel>], iteration_bounds = array<i64: 2, 1>, scalar_prefetch = 0 : i64, scratch_operands = 0 : i64, tpu.core_type = #tpu.core_type<tc>, window_params = [{transform_indices = @transform_0, window_bounds = array<i64: 1, 4, 128>}, {pipeline_mode = #tpu.pipeline_mode<synchronous>, transform_indices = @transform_1, window_bounds = array<i64: 2, 4, 4>}, {pipeline_mode = #tpu.pipeline_mode<synchronous>, transform_indices = @transform_2, window_bounds = array<i64: 2, 4, 1>}, {pipeline_mode = #tpu.pipeline_mode<synchronous>, transform_indices = @transform_3, window_bounds = array<i64: 2, 4, 4>}, {pipeline_mode = #tpu.pipeline_mode<synchronous>, transform_indices = @transform_4, window_bounds = array<i64: 2, 4, 1>}, {transform_indices = @transform_5, window_bounds = array<i64: 1, 4, 128>}]} {
    %c0 = arith.constant 0 : index
    %c0_0 = arith.constant 0 : index
    %c0_1 = arith.constant 0 : index
    %0 = vector.load %arg2[%c0, %c0_0, %c0_1] : memref<1x4x128xf32, #tpu.memory_space<vmem>>, vector<1x4x128xf32>
    %1 = vector.shape_cast %0 : vector<1x4x128xf32> to vector<4x128xf32>
    %c0_i32 = arith.constant 0 : i32
    %2 = arith.index_cast %c0_i32 : i32 to index
    %c0_2 = arith.constant 0 : index
    %c0_3 = arith.constant 0 : index
    %3 = vector.load %arg3[%2, %c0_2, %c0_3] : memref<2x4x4xf32, #tpu.memory_space<vmem>>, vector<1x4x4xf32>
    %4 = vector.shape_cast %3 : vector<1x4x4xf32> to vector<4x4xf32>
    %cst = arith.constant dense<0.000000e+00> : vector<4x128xf32>
    %5 = tpu.matmul %4, %1, %cst {dimension_numbers = #tpu.dot_dimension_numbers<[1], [0], [0], [1], [0, 0, 1, 1], [], []>} : vector<4x4xf32>, vector<4x128xf32>, vector<4x128xf32> -> vector<4x128xf32>
    %6 = arith.index_cast %c0_i32 : i32 to index
    %c0_4 = arith.constant 0 : index
    %c0_5 = arith.constant 0 : index
    %7 = vector.load %arg4[%6, %c0_4, %c0_5] : memref<2x4x1xf32, #tpu.memory_space<vmem>>, vector<1x4x1xf32>
    %8 = vector.shape_cast %7 : vector<1x4x1xf32> to vector<4x1xf32>
    %9 = vector.broadcast %8 : vector<4x1xf32> to vector<4x128xf32>
    %10 = arith.addf %5, %9 : vector<4x128xf32>
    %cst_6 = arith.constant 0.000000e+00 : f32
    %11 = vector.broadcast %cst_6 : f32 to vector<4x128xf32>
    %12 = arith.maximumf %10, %11 : vector<4x128xf32>
    %13 = arith.index_cast %c0_i32 : i32 to index
    %c0_7 = arith.constant 0 : index
    %c0_8 = arith.constant 0 : index
    %14 = vector.load %arg5[%13, %c0_7, %c0_8] : memref<2x4x4xf32, #tpu.memory_space<vmem>>, vector<1x4x4xf32>
    %15 = vector.shape_cast %14 : vector<1x4x4xf32> to vector<4x4xf32>
    %cst_9 = arith.constant dense<0.000000e+00> : vector<4x128xf32>
    %16 = tpu.matmul %15, %12, %cst_9 {dimension_numbers = #tpu.dot_dimension_numbers<[1], [0], [0], [1], [0, 0, 1, 1], [], []>} : vector<4x4xf32>, vector<4x128xf32>, vector<4x128xf32> -> vector<4x128xf32>
    %17 = arith.index_cast %c0_i32 : i32 to index
    %c0_10 = arith.constant 0 : index
    %c0_11 = arith.constant 0 : index
    %18 = vector.load %arg6[%17, %c0_10, %c0_11] : memref<2x4x1xf32, #tpu.memory_space<vmem>>, vector<1x4x1xf32>
    %19 = vector.shape_cast %18 : vector<1x4x1xf32> to vector<4x1xf32>
    %20 = vector.broadcast %19 : vector<4x1xf32> to vector<4x128xf32>
    %21 = arith.addf %16, %20 : vector<4x128xf32>
    %22 = arith.addf %21, %1 : vector<4x128xf32>
    %cst_12 = arith.constant 0.000000e+00 : f32
    %23 = vector.broadcast %cst_12 : f32 to vector<4x128xf32>
    %24 = arith.maximumf %22, %23 : vector<4x128xf32>
    %c1_i32 = arith.constant 1 : i32
    %25 = arith.index_cast %c1_i32 : i32 to index
    %c0_13 = arith.constant 0 : index
    %c0_14 = arith.constant 0 : index
    %26 = vector.load %arg3[%25, %c0_13, %c0_14] : memref<2x4x4xf32, #tpu.memory_space<vmem>>, vector<1x4x4xf32>
    %27 = vector.shape_cast %26 : vector<1x4x4xf32> to vector<4x4xf32>
    %cst_15 = arith.constant dense<0.000000e+00> : vector<4x128xf32>
    %28 = tpu.matmul %27, %24, %cst_15 {dimension_numbers = #tpu.dot_dimension_numbers<[1], [0], [0], [1], [0, 0, 1, 1], [], []>} : vector<4x4xf32>, vector<4x128xf32>, vector<4x128xf32> -> vector<4x128xf32>
    %29 = arith.index_cast %c1_i32 : i32 to index
    %c0_16 = arith.constant 0 : index
    %c0_17 = arith.constant 0 : index
    %30 = vector.load %arg4[%29, %c0_16, %c0_17] : memref<2x4x1xf32, #tpu.memory_space<vmem>>, vector<1x4x1xf32>
    %31 = vector.shape_cast %30 : vector<1x4x1xf32> to vector<4x1xf32>
    %32 = vector.broadcast %31 : vector<4x1xf32> to vector<4x128xf32>
    %33 = arith.addf %28, %32 : vector<4x128xf32>
    %cst_18 = arith.constant 0.000000e+00 : f32
    %34 = vector.broadcast %cst_18 : f32 to vector<4x128xf32>
    %35 = arith.maximumf %33, %34 : vector<4x128xf32>
    %36 = arith.index_cast %c1_i32 : i32 to index
    %c0_19 = arith.constant 0 : index
    %c0_20 = arith.constant 0 : index
    %37 = vector.load %arg5[%36, %c0_19, %c0_20] : memref<2x4x4xf32, #tpu.memory_space<vmem>>, vector<1x4x4xf32>
    %38 = vector.shape_cast %37 : vector<1x4x4xf32> to vector<4x4xf32>
    %cst_21 = arith.constant dense<0.000000e+00> : vector<4x128xf32>
    %39 = tpu.matmul %38, %35, %cst_21 {dimension_numbers = #tpu.dot_dimension_numbers<[1], [0], [0], [1], [0, 0, 1, 1], [], []>} : vector<4x4xf32>, vector<4x128xf32>, vector<4x128xf32> -> vector<4x128xf32>
    %40 = arith.index_cast %c1_i32 : i32 to index
    %c0_22 = arith.constant 0 : index
    %c0_23 = arith.constant 0 : index
    %41 = vector.load %arg6[%40, %c0_22, %c0_23] : memref<2x4x1xf32, #tpu.memory_space<vmem>>, vector<1x4x1xf32>
    %42 = vector.shape_cast %41 : vector<1x4x1xf32> to vector<4x1xf32>
    %43 = vector.broadcast %42 : vector<4x1xf32> to vector<4x128xf32>
    %44 = arith.addf %39, %43 : vector<4x128xf32>
    %45 = arith.addf %44, %24 : vector<4x128xf32>
    %cst_24 = arith.constant 0.000000e+00 : f32
    %46 = vector.broadcast %cst_24 : f32 to vector<4x128xf32>
    %47 = arith.maximumf %45, %46 : vector<4x128xf32>
    %c2_i32 = arith.constant 2 : i32
    %c0_25 = arith.constant 0 : index
    %c0_26 = arith.constant 0 : index
    %c0_27 = arith.constant 0 : index
    %48 = vector.load %arg7[%c0_25, %c0_26, %c0_27] : memref<1x4x128xf32, #tpu.memory_space<vmem>>, vector<1x4x128xf32>
    %49 = vector.shape_cast %48 : vector<1x4x128xf32> to vector<4x128xf32>
    %50 = vector.shape_cast %47 : vector<4x128xf32> to vector<1x4x128xf32>
    tpu.vector_store %arg7[%c0_25, %c0_26, %c0_27], %50 {strides = array<i32>} : memref<1x4x128xf32, #tpu.memory_space<vmem>>, vector<1x4x128xf32>,
    return
  }
  func.func @transform_0(%arg0: i32, %arg1: i32) -> (i32, i32, i32) {
    %c0_i32 = arith.constant 0 : i32
    %c0_i32_0 = arith.constant 0 : i32
    return %arg0, %c0_i32, %arg1 : i32, i32, i32
  }
  func.func @transform_1(%arg0: i32, %arg1: i32) -> (i32, i32, i32) {
    %c0_i32 = arith.constant 0 : i32
    %c0_i32_0 = arith.constant 0 : i32
    %c0_i32_1 = arith.constant 0 : i32
    %c0_i32_2 = arith.constant 0 : i32
    return %c0_i32, %c0_i32_0, %c0_i32_1 : i32, i32, i32
  }
  func.func @transform_2(%arg0: i32, %arg1: i32) -> (i32, i32, i32) {
    %c0_i32 = arith.constant 0 : i32
    %c0_i32_0 = arith.constant 0 : i32
    %c0_i32_1 = arith.constant 0 : i32
    %c0_i32_2 = arith.constant 0 : i32
    return %c0_i32, %c0_i32_0, %c0_i32_1 : i32, i32, i32
  }
  func.func @transform_3(%arg0: i32, %arg1: i32) -> (i32, i32, i32) {
    %c0_i32 = arith.constant 0 : i32
    %c0_i32_0 = arith.constant 0 : i32
    %c0_i32_1 = arith.constant 0 : i32
    %c0_i32_2 = arith.constant 0 : i32
    return %c0_i32, %c0_i32_0, %c0_i32_1 : i32, i32, i32
  }
  func.func @transform_4(%arg0: i32, %arg1: i32) -> (i32, i32, i32) {
    %c0_i32 = arith.constant 0 : i32
    %c0_i32_0 = arith.constant 0 : i32
    %c0_i32_1 = arith.constant 0 : i32
    %c0_i32_2 = arith.constant 0 : i32
    return %c0_i32, %c0_i32_0, %c0_i32_1 : i32, i32, i32
  }
  func.func @transform_5(%arg0: i32, %arg1: i32) -> (i32, i32, i32) {
    %c0_i32 = arith.constant 0 : i32
    %c0_i32_0 = arith.constant 0 : i32
    return %arg0, %c0_i32, %arg1 : i32, i32, i32
  }
}

</mosaic_0001>

<llo_original>
// kernel: pos_extraction_forward.1
$region0: #{pos_extraction_forward.1}
  #allocation0 [shape = 'u32[]', space=smem, size = 0x4, offset = 0x4, fixed_abs, tag = 'smem constant byte address 0x4 - core index']
  #allocation1 [shape = 'u32[72,128]{1,0:T(1,128)}', space=vmem, size = 0x9000, scoped, tag = 'internal scratch']
  %s0 = inlined_call_operand.hbm [shape: f32[2,4,16], index: 0, kind: input, shape index: {}, may-alias: {0,5}]
  %s1 = inlined_call_operand.vmem [shape: f32[2,4,4], index: 1, kind: input, shape index: {}]
  %s2 = inlined_call_operand.vmem [shape: f32[2,4,1], index: 2, kind: input, shape index: {}]
  %s3 = inlined_call_operand.vmem [shape: f32[2,4,4], index: 3, kind: input, shape index: {}]
  %s4 = inlined_call_operand.vmem [shape: f32[2,4,1], index: 4, kind: input, shape index: {}]
  %s5 = inlined_call_operand.hbm [shape: f32[2,4,16], index: 5, kind: output, shape index: {}, may-alias: {0,5}]
  %s6 = sld [smem:[#allocation0]]
  $region57: #{pos_extraction_forward.1} parent=0
    _
  %s8 = ssub.s32 1, %s6
  %s9 = scalar_select 0, %s8, %s6
  $region1: #{pos_extraction_forward.1} parent=0
    #allocation2 [shape = 'u8[4096]{0}', space=vmem, size = 0x1000, scoped, tag = 'input window, operand 0']
    #allocation3 [shape = 's32[2]{0}', space=sflag, size = 0x8, scoped, tag = 'scoped memory for pos_extraction_forward.1']
    #allocation4 [shape = 's32[2]{0}', space=sflag, size = 0x8, scoped, tag = 'scoped memory for pos_extraction_forward.1']
    #allocation5 [shape = 'u8[4096]{0}', space=vmem, size = 0x1000, scoped, tag = 'output window, operand 0']
    %10 = vsyncpa [#allocation3], 0
    %s11 = scalar_lea.sflag [#allocation3], 1
    %12 = vsyncpa %s11, 0
    %13 = vsyncpa [#allocation4], 0
    %s14 = scalar_lea.sflag [#allocation4], 1
    %15 = vsyncpa %s14, 0
    loop: start=0, step=1, limit=4
    $region2: #{pos_extraction_forward.1} parent=1 // loop_pre_header
      _
    $region3: #{pos_extraction_forward.1} parent=1 // loop_header
      %s17 = sphi 0, %s21
      %p18 = scmp.ge.s32.totalorder %s17, 4
      %s24 = sphi 0, %s36
      %s25 = sphi 0, %s32
      %s26 = sphi 0, %s24
      %s27 = sphi 0, %s25
      %s28 = sphi 0, %s26
      %s29 = sphi 0, %s27
      %s41 = sphi 0, %s43
      %s44 = sphi 0, %s41
      %s45 = sphi 0, %s44
      %s61 = sphi 0, %s45
      %s65 = sphi 0, %s65
      %s67 = sphi 0, %s65
      %s68 = sphi 0, %s67
      %s82 = sphi 0, %s68
      %s86 = sphi 0, %s86
      %s88 = sphi 0, %s86
      %s89 = sphi 0, %s88
      %s103 = sphi 0, %s89
      %s107 = sphi 0, %s107
      %s109 = sphi 0, %s107
      %s110 = sphi 0, %s109
      %s124 = sphi 0, %s110
      %s128 = sphi 0, %s128
      %s130 = sphi 0, %s128
      %s131 = sphi 0, %s130
      %s145 = sphi 0, %s131
      %s153 = sphi 0, %s155
      %s156 = sphi 0, %s153
      %s157 = sphi 0, %s156
      %s173 = sphi 0, %s157
    $region4: #{pos_extraction_forward.1} parent=1 // loop_header_branch
      %20 = sbr.rel (%p18) target = $region8
    $region5: #{pos_extraction_forward.1} parent=1 // loop_body
      %s22 = ssub.s32 %s17, 1
      %s23 = ssub.s32 %s17, 2
      %s30 = sadd.s32 1, %s25
      %p31 = scmp.ge.s32.totalorder %s30, 1
      %s32 = scalar_select %p31, 0, %s30
      %s33 = sadd.s32 1, %s24
      %s34 = scalar_select %p31, %s33, %s24
      %p35 = scmp.ge.s32.totalorder %s34, 2
      %s36 = scalar_select %p35, 0, %s34
      %s37 = ssub.s32 %s24, %s36
      %s38 = ssub.s32 %s25, %s32
      %s39 = sor.u32 %s37, %s38
      %p40 = scmp.eq.s32.totalorder %s39, 0
      %s42 = sadd.s32 %s41, 1
      %s43 = scalar_select %p40, %s41, %s42
      %p46 = pneg %p40
      %p47 = scmp.eq.s32.totalorder %s17, 1
      %p48 = por %p46, %p47
      %p49 = scmp.ne.s32.totalorder %s41, %s44
      %p50 = scmp.eq.s32.totalorder %s17, 0
      %p51 = por %p49, %p50
      %p52 = scmp.ne.s32.totalorder %s41, %s44
      %p53 = scmp.eq.s32.totalorder %s22, 1
      %p54 = por %p52, %p53
      %p55 = scmp.ne.s32.totalorder %s44, %s45
      %p56 = scmp.eq.s32.totalorder %s22, 0
      %p57 = por %p55, %p56
      %p58 = scmp.ne.s32.totalorder %s44, %s45
      %p59 = scmp.eq.s32.totalorder %s23, 1
      %p60 = por %p58, %p59
      %p62 = scmp.ne.s32.totalorder %s45, %s61
      %p63 = scmp.eq.s32.totalorder %s23, 0
      %p64 = por %p62, %p63
      %s66 = sadd.s32 %s65, 1
      %p69 = scmp.eq.s32.totalorder %s17, 1
      %p70 = scmp.ne.s32.totalorder %s65, %s67
      %p71 = scmp.eq.s32.totalorder %s17, 0
      %p72 = por %p70, %p71
      %p73 = scmp.ne.s32.totalorder %s65, %s67
      %p74 = scmp.eq.s32.totalorder %s22, 1
      %p75 = por %p73, %p74
      %p76 = scmp.ne.s32.totalorder %s67, %s68
      %p77 = scmp.eq.s32.totalorder %s22, 0
      %p78 = por %p76, %p77
      %p79 = scmp.ne.s32.totalorder %s67, %s68
      %p80 = scmp.eq.s32.totalorder %s23, 1
      %p81 = por %p79, %p80
      %p83 = scmp.ne.s32.totalorder %s68, %s82
      %p84 = scmp.eq.s32.totalorder %s23, 0
      %p85 = por %p83, %p84
      %s87 = sadd.s32 %s86, 1
      %p90 = scmp.eq.s32.totalorder %s17, 1
      %p91 = scmp.ne.s32.totalorder %s86, %s88
      %p92 = scmp.eq.s32.totalorder %s17, 0
      %p93 = por %p91, %p92
      %p94 = scmp.ne.s32.totalorder %s86, %s88
      %p95 = scmp.eq.s32.totalorder %s22, 1
      %p96 = por %p94, %p95
      %p97 = scmp.ne.s32.totalorder %s88, %s89
      %p98 = scmp.eq.s32.totalorder %s22, 0
      %p99 = por %p97, %p98
      %p100 = scmp.ne.s32.totalorder %s88, %s89
      %p101 = scmp.eq.s32.totalorder %s23, 1
      %p102 = por %p100, %p101
      %p104 = scmp.ne.s32.totalorder %s89, %s103
      %p105 = scmp.eq.s32.totalorder %s23, 0
      %p106 = por %p104, %p105
      %s108 = sadd.s32 %s107, 1
      %p111 = scmp.eq.s32.totalorder %s17, 1
      %p112 = scmp.ne.s32.totalorder %s107, %s109
      %p113 = scmp.eq.s32.totalorder %s17, 0
      %p114 = por %p112, %p113
      %p115 = scmp.ne.s32.totalorder %s107, %s109
      %p116 = scmp.eq.s32.totalorder %s22, 1
      %p117 = por %p115, %p116
      %p118 = scmp.ne.s32.totalorder %s109, %s110
      %p119 = scmp.eq.s32.totalorder %s22, 0
      %p120 = por %p118, %p119
      %p121 = scmp.ne.s32.totalorder %s109, %s110
      %p122 = scmp.eq.s32.totalorder %s23, 1
      %p123 = por %p121, %p122
      %p125 = scmp.ne.s32.totalorder %s110, %s124
      %p126 = scmp.eq.s32.totalorder %s23, 0
      %p127 = por %p125, %p126
      %s129 = sadd.s32 %s128, 1
      %p132 = scmp.eq.s32.totalorder %s17, 1
      %p133 = scmp.ne.s32.totalorder %s128, %s130
      %p134 = scmp.eq.s32.totalorder %s17, 0
      %p135 = por %p133, %p134
      %p136 = scmp.ne.s32.totalorder %s128, %s130
      %p137 = scmp.eq.s32.totalorder %s22, 1
      %p138 = por %p136, %p137
      %p139 = scmp.ne.s32.totalorder %s130, %s131
      %p140 = scmp.eq.s32.totalorder %s22, 0
      %p141 = por %p139, %p140
      %p142 = scmp.ne.s32.totalorder %s130, %s131
      %p143 = scmp.eq.s32.totalorder %s23, 1
      %p144 = por %p142, %p143
      %p146 = scmp.ne.s32.totalorder %s131, %s145
      %p147 = scmp.eq.s32.totalorder %s23, 0
      %p148 = por %p146, %p147
      %s149 = ssub.s32 %s24, %s36
      %s150 = ssub.s32 %s25, %s32
      %s151 = sor.u32 %s149, %s150
      %p152 = scmp.eq.s32.totalorder %s151, 0
      %s154 = sadd.s32 %s153, 1
      %s155 = scalar_select %p152, %s153, %s154
      %p158 = pneg %p152
      %p159 = scmp.eq.s32.totalorder %s17, 1
      %p160 = por %p158, %p159
      %p161 = scmp.ne.s32.totalorder %s153, %s156
      %p162 = scmp.eq.s32.totalorder %s17, 0
      %p163 = por %p161, %p162
      %p164 = scmp.ne.s32.totalorder %s153, %s156
      %p165 = scmp.eq.s32.totalorder %s22, 1
      %p166 = por %p164, %p165
      %p167 = scmp.ne.s32.totalorder %s156, %s157
      %p168 = scmp.eq.s32.totalorder %s22, 0
      %p169 = por %p167, %p168
      %p170 = scmp.ne.s32.totalorder %s156, %s157
      %p171 = scmp.eq.s32.totalorder %s23, 1
      %p172 = por %p170, %p171
      %p174 = scmp.ne.s32.totalorder %s157, %s173
      %p175 = scmp.eq.s32.totalorder %s23, 0
      %p176 = por %p174, %p175
      %p177 = scmp.le.s32.totalorder 1, %s17
      %p178 = scmp.lt.s32.totalorder %s17, 3
      %p179 = pnand %p177, %p178
      %p180 = pneg %p179
      // Predicated region
      $region9: #{pos_extraction_forward.1} parent=5 // pred_check
        _
      $region10: #{pos_extraction_forward.1} parent=5 // pred_check_branch
        %182 = sbr.rel (%p179) target = $region12
      $region11: #{pos_extraction_forward.1} parent=5 // pred_region
        %s183 = ssub.s32 %s17, 1
        // Predicated region
        $region13: #{pos_extraction_forward.1} parent=11 // pred_check
          %p184 = pneg %p78
        $region14: #{pos_extraction_forward.1} parent=11 // pred_check_branch
          %186 = sbr.rel (%p184) target = $region16
        $region15: #{pos_extraction_forward.1} parent=11 // pred_region
          _
        $region16: #{pos_extraction_forward.1} parent=11 // pred_fallthru
          _
        // Predicated region
        $region17: #{pos_extraction_forward.1} parent=11 // pred_check
          %p187 = pneg %p99
        $region18: #{pos_extraction_forward.1} parent=11 // pred_check_branch
          %189 = sbr.rel (%p187) target = $region20
        $region19: #{pos_extraction_forward.1} parent=11 // pred_region
          _
        $region20: #{pos_extraction_forward.1} parent=11 // pred_fallthru
          _
        // Predicated region
        $region21: #{pos_extraction_forward.1} parent=11 // pred_check
          %p190 = pneg %p120
        $region22: #{pos_extraction_forward.1} parent=11 // pred_check_branch
          %192 = sbr.rel (%p190) target = $region24
        $region23: #{pos_extraction_forward.1} parent=11 // pred_region
          _
        $region24: #{pos_extraction_forward.1} parent=11 // pred_fallthru
          _
        // Predicated region
        $region25: #{pos_extraction_forward.1} parent=11 // pred_check
          %p193 = pneg %p141
        $region26: #{pos_extraction_forward.1} parent=11 // pred_check_branch
          %195 = sbr.rel (%p193) target = $region28
        $region27: #{pos_extraction_forward.1} parent=11 // pred_region
          _
        $region28: #{pos_extraction_forward.1} parent=11 // pred_fallthru
          _
      $region12: #{pos_extraction_forward.1} parent=5 // pred_fallthru
        _
      %p196 = scmp.lt.s32.totalorder %s17, 2
      // Predicated region
      $region29: #{pos_extraction_forward.1} parent=5 // pred_check
        %p197 = pneg %p196
      $region30: #{pos_extraction_forward.1} parent=5 // pred_check_branch
        %199 = sbr.rel (%p197) target = $region32
      $region31: #{pos_extraction_forward.1} parent=5 // pred_region
        // Predicated region
        $region33: #{pos_extraction_forward.1} parent=31 // pred_check
          %p200 = pneg %p51
        $region34: #{pos_extraction_forward.1} parent=31 // pred_check_branch
          %202 = sbr.rel (%p200) target = $region36
        $region35: #{pos_extraction_forward.1} parent=31 // pred_region
          %s203 = sand.u32 %s41, 1
          %s204 = scalar_lea.sflag [#allocation3], %s203
          %s205 = sand.u32 %s41, 1
          %s206 = smul.addr %s205, 4
          %s207 = scalar_lea.vmem [#allocation2], %s206
          %209 = vsyncadd %s204, 0
          %s210 = sadd.s32 %s25, %s24
          %s211 = smul.addr %s210, 4
          %s212 = scalar_lea.hbm %s0, %s211
          %s214 = sshll.u32 %s212, 4
          %s215 = int_to_ptr.hbm [resolvable:$true] %s214
          %s216 = sshll.u32 %s207, 4
          %s217 = int_to_ptr.vmem [resolvable:$true] %s216
          %219 = dma.hbm_to_vmem [thread:$0]  %s215, 64, %s217, %s204
        $region36: #{pos_extraction_forward.1} parent=31 // pred_fallthru
          _
      $region32: #{pos_extraction_forward.1} parent=5 // pred_fallthru
        _
      %p220 = scmp.le.s32.totalorder 1, %s17
      %p221 = scmp.lt.s32.totalorder %s17, 3
      %p222 = pnand %p220, %p221
      %p223 = pneg %p222
      // Predicated region
      $region37: #{pos_extraction_forward.1} parent=5 // pred_check
        _
      $region38: #{pos_extraction_forward.1} parent=5 // pred_check_branch
        %225 = sbr.rel (%p222) target = $region40
      $region39: #{pos_extraction_forward.1} parent=5 // pred_region
        %s226 = ssub.s32 %s17, 1
        %s227 = sand.u32 %s44, 1
        %s228 = scalar_lea.sflag [#allocation3], %s227
        %s229 = sand.u32 %s44, 1
        %s230 = smul.addr %s229, 4
        %s231 = scalar_lea.vmem [#allocation2], %s230
        // Predicated region
        $region41: #{pos_extraction_forward.1} parent=39 // pred_check
          %p232 = pneg %p57
        $region42: #{pos_extraction_forward.1} parent=39 // pred_check_branch
          %234 = sbr.rel (%p232) target = $region44
        $region43: #{pos_extraction_forward.1} parent=39 // pred_region
          %236 = dma.done %s228, 64
        $region44: #{pos_extraction_forward.1} parent=39 // pred_fallthru
          _
        %s237 = sand.u32 %s44, 1
        %s238 = scalar_lea.sflag [#allocation3], %s237
        %s239 = sand.u32 %s44, 1
        %s240 = smul.addr %s239, 4
        %s241 = scalar_lea.vmem [#allocation2], %s240
        %p242 = pneg %p57
        %p243 = pneg %p54
        %p244 = pneg %p78
        %p245 = pneg %p75
        %p246 = pneg %p99
        %p247 = pneg %p96
        %p248 = pneg %p120
        %p249 = pneg %p117
        %p250 = pneg %p141
        %p251 = pneg %p138
        %p252 = pneg %p169
        %p253 = pneg %p166
        %s254 = sand.u32 %s156, 1
        %s255 = scalar_lea.sflag [#allocation4], %s254
        %s256 = sand.u32 %s156, 1
        %s257 = smul.addr %s256, 4
        %s258 = scalar_lea.vmem [#allocation5], %s257
        %v259 = vld [vmem:[%s231] sm:$0xf]
        %v260 = vld [vmem:[%s1] sm:$0xf]
        %v261 = vld [vmem:[%s2] sm:$0xf]
        %263 = vset.pattern.permute.xlu0 0
        %264 = vperm.xlu0 %263, %v261
        %v265 = vpop.permute.xlu0 %264
        %vm267 = vcmask 31744
        %v269 = vsel %vm267, %v260, 0
        %vm271 = vcmask 1043456
        %v273 = vsel %vm271, %v259, 0
        %275 = vmatpush.msra.mxu0 0.0
        %276 = vmatpush.msra.mxu0 0.0
        %277 = vmatpush.msra.mxu0 0.0
        %278 = vmatpush.msra.mxu0 0.0
        %279 = vmatpush.msra.mxu0 0.0
        %280 = vmatpush.msra.mxu0 0.0
        %281 = vmatpush.msra.mxu0 0.0
        %282 = vmatpush.msra.mxu0 0.0
        %283 = vmatpush.msra.mxu0 0.0
        %284 = vmatpush.msra.mxu0 0.0
        %285 = vmatpush.msra.mxu0 0.0
        %286 = vmatpush.msra.mxu0 0.0
        %287 = vmatpush.msra.mxu0 0.0
        %288 = vmatpush.msra.mxu0 0.0
        %289 = vmatpush.msra.mxu0 0.0
        %290 = vmatpush.msra.mxu0 %v273
        %291 = vmatmul.f32.gmra.mxu0 %v269
        %v292 = vpop.f32.mrf.mxu0
        %v293 = vadd.f32 %v265, %v292
        %294 = vdwg.mxu0
        %v295 = vmax.f32 %v293, 0.0
        %v296 = vld [vmem:[%s3] sm:$0xf]
        %v297 = vld [vmem:[%s4] sm:$0xf]
        %299 = vset.pattern.permute.xlu0 0
        %300 = vperm.xlu0 %299, %v297
        %v301 = vpop.permute.xlu0 %300
        %v304 = vsel %vm267, %v296, 0
        %v307 = vsel %vm271, %v295, 0
        %309 = vmatpush.msra.mxu0 0.0
        %310 = vmatpush.msra.mxu0 0.0
        %311 = vmatpush.msra.mxu0 0.0
        %312 = vmatpush.msra.mxu0 0.0
        %313 = vmatpush.msra.mxu0 0.0
        %314 = vmatpush.msra.mxu0 0.0
        %315 = vmatpush.msra.mxu0 0.0
        %316 = vmatpush.msra.mxu0 0.0
        %317 = vmatpush.msra.mxu0 0.0
        %318 = vmatpush.msra.mxu0 0.0
        %319 = vmatpush.msra.mxu0 0.0
        %320 = vmatpush.msra.mxu0 0.0
        %321 = vmatpush.msra.mxu0 0.0
        %322 = vmatpush.msra.mxu0 0.0
        %323 = vmatpush.msra.mxu0 0.0
        %324 = vmatpush.msra.mxu0 %v307
        %325 = vmatmul.f32.gmra.mxu0 %v304
        %v326 = vpop.f32.mrf.mxu0
        %v327 = vadd.f32 %v301, %v326
        %328 = vdwg.mxu0
        %v329 = vadd.f32 %v327, %v259
        %v330 = vmax.f32 %v329, 0.0
        %s331 = scalar_lea.vmem %s1, 4
        %v332 = vld [vmem:[%s331] sm:$0xf]
        %s333 = scalar_lea.vmem %s2, 4
        %v334 = vld [vmem:[%s333] sm:$0xf]
        %336 = vset.pattern.permute.xlu0 0
        %337 = vperm.xlu0 %336, %v334
        %v338 = vpop.permute.xlu0 %337
        %v341 = vsel %vm267, %v332, 0
        %v344 = vsel %vm271, %v330, 0
        %346 = vmatpush.msra.mxu0 0.0
        %347 = vmatpush.msra.mxu0 0.0
        %348 = vmatpush.msra.mxu0 0.0
        %349 = vmatpush.msra.mxu0 0.0
        %350 = vmatpush.msra.mxu0 0.0
        %351 = vmatpush.msra.mxu0 0.0
        %352 = vmatpush.msra.mxu0 0.0
        %353 = vmatpush.msra.mxu0 0.0
        %354 = vmatpush.msra.mxu0 0.0
        %355 = vmatpush.msra.mxu0 0.0
        %356 = vmatpush.msra.mxu0 0.0
        %357 = vmatpush.msra.mxu0 0.0
        %358 = vmatpush.msra.mxu0 0.0
        %359 = vmatpush.msra.mxu0 0.0
        %360 = vmatpush.msra.mxu0 0.0
        %361 = vmatpush.msra.mxu0 %v344
        %362 = vmatmul.f32.gmra.mxu0 %v341
        %v363 = vpop.f32.mrf.mxu0
        %v364 = vadd.f32 %v338, %v363
        %365 = vdwg.mxu0
        %v366 = vmax.f32 %v364, 0.0
        %s367 = scalar_lea.vmem %s3, 4
        %v368 = vld [vmem:[%s367] sm:$0xf]
        %s369 = scalar_lea.vmem %s4, 4
        %v370 = vld [vmem:[%s369] sm:$0xf]
        %372 = vset.pattern.permute.xlu0 0
        %373 = vperm.xlu0 %372, %v370
        %v374 = vpop.permute.xlu0 %373
        %v377 = vsel %vm267, %v368, 0
        %v380 = vsel %vm271, %v366, 0
        %382 = vmatpush.msra.mxu0 0.0
        %383 = vmatpush.msra.mxu0 0.0
        %384 = vmatpush.msra.mxu0 0.0
        %385 = vmatpush.msra.mxu0 0.0
        %386 = vmatpush.msra.mxu0 0.0
        %387 = vmatpush.msra.mxu0 0.0
        %388 = vmatpush.msra.mxu0 0.0
        %389 = vmatpush.msra.mxu0 0.0
        %390 = vmatpush.msra.mxu0 0.0
        %391 = vmatpush.msra.mxu0 0.0
        %392 = vmatpush.msra.mxu0 0.0
        %393 = vmatpush.msra.mxu0 0.0
        %394 = vmatpush.msra.mxu0 0.0
        %395 = vmatpush.msra.mxu0 0.0
        %396 = vmatpush.msra.mxu0 0.0
        %397 = vmatpush.msra.mxu0 %v380
        %398 = vmatmul.f32.gmra.mxu0 %v377
        %v399 = vpop.f32.mrf.mxu0
        %v400 = vadd.f32 %v374, %v399
        %401 = vdwg.mxu0
        %v402 = vadd.f32 %v400, %v330
        %v403 = vmax.f32 %v402, 0.0
        %404 = vst [vmem:[%s258] sm:$0xf] %v403
        %s405 = sand.u32 %s156, 1
        %s406 = scalar_lea.sflag [#allocation4], %s405
        %s407 = sand.u32 %s156, 1
        %s408 = smul.addr %s407, 4
        %s409 = scalar_lea.vmem [#allocation5], %s408
        // Predicated region
        $region45: #{pos_extraction_forward.1} parent=39 // pred_check
          %p410 = pneg %p166
        $region46: #{pos_extraction_forward.1} parent=39 // pred_check_branch
          %412 = sbr.rel (%p410) target = $region48
        $region47: #{pos_extraction_forward.1} parent=39 // pred_region
          %414 = vsyncadd %s406, 0
          %s415 = sadd.s32 %s27, %s26
          %s416 = smul.addr %s415, 4
          %s417 = scalar_lea.hbm %s5, %s416
          %s419 = sshll.u32 %s409, 4
          %s420 = int_to_ptr.vmem [resolvable:$true] %s419
          %s421 = sshll.u32 %s417, 4
          %s422 = int_to_ptr.hbm [resolvable:$true] %s421
          %424 = dma.vmem_to_hbm [thread:$0]  %s420, 64, %s422, %s406
        $region48: #{pos_extraction_forward.1} parent=39 // pred_fallthru
          _
      $region40: #{pos_extraction_forward.1} parent=5 // pred_fallthru
        _
      %p425 = scmp.le.s32.totalorder 2, %s17
      // Predicated region
      $region49: #{pos_extraction_forward.1} parent=5 // pred_check
        %p426 = pneg %p425
      $region50: #{pos_extraction_forward.1} parent=5 // pred_check_branch
        %428 = sbr.rel (%p426) target = $region52
      $region51: #{pos_extraction_forward.1} parent=5 // pred_region
        %s429 = ssub.s32 %s17, 2
        // Predicated region
        $region53: #{pos_extraction_forward.1} parent=51 // pred_check
          %p430 = pneg %p172
        $region54: #{pos_extraction_forward.1} parent=51 // pred_check_branch
          %432 = sbr.rel (%p430) target = $region56
        $region55: #{pos_extraction_forward.1} parent=51 // pred_region
          %s433 = sand.u32 %s157, 1
          %s434 = scalar_lea.sflag [#allocation4], %s433
          %s435 = sand.u32 %s157, 1
          %s436 = smul.addr %s435, 4
          %s437 = scalar_lea.vmem [#allocation5], %s436
          %439 = dma.done %s434, 64
        $region56: #{pos_extraction_forward.1} parent=51 // pred_fallthru
          _
      $region52: #{pos_extraction_forward.1} parent=5 // pred_fallthru
        _
    $region6: #{pos_extraction_forward.1} parent=1 // loop_footer
      %s21 = sadd.s32 1, %s17
    $region7: #{pos_extraction_forward.1} parent=1 // loop_footer_branch
      %16 = sbr.rel target = $region3
    $region8: #{pos_extraction_forward.1} parent=1 // loop_exit
      _
    %440 = vsyncpa [#allocation3], 1
    %s441 = scalar_lea.sflag [#allocation3], 1
    %442 = vsyncpa %s441, 1
    %443 = vsyncpa [#allocation4], 1
    %s444 = scalar_lea.sflag [#allocation4], 1
    %445 = vsyncpa %s444, 1

</llo_original>
